<compile_context>
chip_gen: v5e
topology: v5e:2x2
jax: 0.10.0
libtpu: 0.0.40
codegen_flags: <defaults>
</compile_context>

<pallas_src>
import functools

import jax
import jax.numpy as jnp
from jax import lax
from jax.experimental import pallas as pl
from jax.experimental.pallas import tpu as pltpu


_VMEM_BUDGET = 48 * 1024 * 1024       # target working set (fits v7x 64 MiB/TC)
_VMEM_LIMIT_FLOOR = 32 * 1024 * 1024
_VMEM_LIMIT_CAP = 64 * 1024 * 1024
_SUBLANE = {4: 8, 2: 16, 1: 32}       # second-minor tiling quantum by itemsize


def _round_up(a, b):
    return (a + b - 1) // b * b


def _select_tiles(out_dim, in_dim, block_rows, block_cols, x_itemsize, w_itemsize):
    """Pick (tm_cap, tn) so double-buffered tiles + f32 temporaries fit the
    cross-generation VMEM budget.  Must be called with identical arguments by
    prepare_weight and the forward wrapper."""
    sub = _SUBLANE[x_itemsize]
    tm = max(_round_up(block_rows, sub), sub)
    tn = max(_round_up(min(out_dim, block_cols), 128), 128)

    def est(tm_, tn_):
        return (2 * tm_ * in_dim * x_itemsize      # x tiles (double-buffered)
                + 2 * in_dim * tn_ * w_itemsize    # W tiles (double-buffered)
                + 2 * tm_ * tn_ * x_itemsize       # out tiles (double-buffered)
                + tm_ * in_dim * 4                 # f32 sum-of-squares temp
                + 2 * tm_ * tn_ * 4                # f32 matmul product/acc
                + (4 << 20))                       # r-cache + misc headroom

    while tn > 128 and est(tm, tn) > _VMEM_BUDGET:
        tn -= 128
    while tm > sub and est(tm, tn) > _VMEM_BUDGET:
        tm -= sub
    return tm, tn


def prepare_weight(weight, *, block_rows=256, block_cols=1024, x_dtype=None):
    """One-time (per parameter value) weight prep.

    weight: (out_dim, in_dim) nn.Linear layout.
    Returns w_t of shape (in_dim, out_p): transposed and zero-padded so the hot
    path never transposes or pads W.  Use the same block_rows/block_cols (and
    activation dtype) that you pass to linear_head_scaled_cos_norm.
    """
    out_dim, in_dim = weight.shape
    x_itemsize = jnp.dtype(x_dtype or weight.dtype).itemsize
    _, tn = _select_tiles(out_dim, in_dim, block_rows, block_cols,
                          x_itemsize, jnp.dtype(weight.dtype).itemsize)
    out_p = _round_up(out_dim, tn)
    w_t = weight.T                                  # (in_dim, out_dim)
    if out_p != out_dim:
        w_t = jnp.pad(w_t, ((0, 0), (0, out_p - out_dim)))
    return w_t


def _linear_head_kernel(scale_ref, x_ref, w_ref, o_ref, *scratch, cache_r):
    # scale_ref: SMEM (1,) f32 learned scalar
    # x_ref:     VMEM (tm, in_dim)  activation row tile (native dtype)
    # w_ref:     VMEM (in_dim, tn)  pre-transposed weight tile (block index only
    #                               depends on the outer grid axis -> resident
    #                               across the whole inner row sweep)
    # o_ref:     VMEM (tm, tn)      output tile
    # scratch:   () or (r_ref,) with r_ref: VMEM (num_row_blocks, tm, 1) f32
    x = x_ref[...]

    def row_scale():
        # F.normalize eps: x / max(||x||, 1e-12) == x * rsqrt(max(||x||^2, 1e-24)).
        # Fold the learned scale in; it is applied to the f32 accumulator below.
        sq = jnp.sum((x * x).astype(jnp.float32), axis=-1, keepdims=True)
        return scale_ref[0] * lax.rsqrt(jnp.maximum(sq, 1e-24))

    if cache_r:
        (r_ref,) = scratch
        i = pl.program_id(1)

        @pl.when(pl.program_id(0) == 0)        # first out-block sweep only
        def _():
            r_ref[i] = row_scale()

        r = r_ref[i]                           # (tm, 1) f32
    else:
        r = row_scale()

    # (tm, in_dim) @ (in_dim, tn) on the MXU, f32 accumulation, native-dtype
    # operands (no f32 upcast / bf16 re-cast of the activation tile).
    y = jnp.dot(x, w_ref[...], preferred_element_type=jnp.float32)
    o_ref[...] = (y * r).astype(o_ref.dtype)


@functools.partial(
    jax.jit,
    static_argnames=("out_dim", "block_rows", "block_cols", "row_core_parallel"),
)
def linear_head_scaled_cos_norm(x, w_t, scale, out_dim, *,
                                block_rows=256, block_cols=1024,
                                row_core_parallel=False):
    """x: (..., in_dim); w_t: prepare_weight output (in_dim, out_p); scale: (1,)."""
    in_dim = x.shape[-1]
    assert w_t.shape[0] == in_dim, "w_t must be prepare_weight(weight) = W.T padded"
    out_p = w_t.shape[1]
    lead = x.shape[:-1]

    x2d = x.reshape(-1, in_dim)
    rows = x2d.shape[0]

    x_itemsize = jnp.dtype(x.dtype).itemsize
    w_itemsize = jnp.dtype(w_t.dtype).itemsize
    tm_cap, tn = _select_tiles(out_dim, in_dim, block_rows, block_cols,
                               x_itemsize, w_itemsize)
    assert out_p % tn == 0, (
        "w_t was prepared with different block_rows/block_cols/dtype; call "
        "prepare_weight with the same settings as this call.")

    # Row tile: one full-extent block for small inputs (no padding); otherwise a
    # bounded tile with a cdiv grid (ragged tail handled by Pallas boundary
    # masking -- all math is per-row, so garbage tail rows never leak).
    tm = rows if rows <= tm_cap else tm_cap
    num_i = pl.cdiv(rows, tm)
    num_j = out_p // tn

    # Cache per-row norm factors across out-dim blocks when there is reuse and
    # the (lane-padded) cache stays small.
    r_cache_bytes = num_i * _round_up(tm, 8) * 128 * 4
    cache_r = (num_j > 1) and (r_cache_bytes <= (4 << 20))

    est = (2 * tm * in_dim * x_itemsize + 2 * in_dim * tn * w_itemsize
           + 2 * tm * tn * x_itemsize + tm * in_dim * 4 + 2 * tm * tn * 4
           + (r_cache_bytes if cache_r else 0))
    vmem_limit = int(min(max(est * 5 // 4 + (2 << 20), _VMEM_LIMIT_FLOOR),
                         _VMEM_LIMIT_CAP))

    scale_f32 = scale.astype(jnp.float32).reshape(1)

    row_sem = pltpu.CORE_PARALLEL if row_core_parallel else pltpu.PARALLEL
    grid = (num_j, num_i)            # out-dim blocks outer, row blocks inner

    out = pl.pallas_call(
        functools.partial(_linear_head_kernel, cache_r=cache_r),
        out_shape=jax.ShapeDtypeStruct((rows, out_p), x.dtype),
        grid=grid,
        in_specs=[
            pl.BlockSpec(memory_space=pltpu.SMEM),               # scale scalar
            pl.BlockSpec((tm, in_dim), lambda j, i: (i, 0)),     # x row tile
            pl.BlockSpec((in_dim, tn), lambda j, i: (0, j)),     # W tile (resident over i)
        ],
        out_specs=pl.BlockSpec((tm, tn), lambda j, i: (i, j)),
        scratch_shapes=(
            [pltpu.VMEM((num_i, tm, 1), jnp.float32)] if cache_r else []),
        compiler_params=pltpu.CompilerParams(
            # The out-dim axis carries the r-cache dependency -> "arbitrary";
            # the row axis is independent -> parallel (CORE_PARALLEL on v7x).
            dimension_semantics=(pltpu.ARBITRARY, row_sem),
            vmem_limit_bytes=vmem_limit,
        ),
    )(scale_f32, x2d, w_t)

    if out_p != out_dim:
        out = out[:, :out_dim]
    return out.reshape(*lead, out_dim)


def init_params(key, in_dim, out_dim, init_scale=1.0):
    """Synthetic init matching the module's parameter shapes.

    nn.Linear weight: (out_dim, in_dim), trunc_normal_(std=0.02); no bias.
    scale_layer: (1,) initialized to init_scale.
    """
    wkey, _ = jax.random.split(key)
    w = 0.02 * jax.random.truncated_normal(
        wkey, -2.0, 2.0, (out_dim, in_dim), dtype=jnp.float32)
    scale = jnp.array([init_scale], dtype=jnp.float32)
    return w, scale


def _reference(x, weight, scale):
    xn = x / jnp.maximum(
        jnp.sqrt(jnp.sum(x * x, axis=-1, keepdims=True)), 1e-12)
    return (xn @ weight.T) * scale[0]


if __name__ == "__main__":
    key = jax.random.PRNGKey(0)
    kx, kp, kx2, kp2, kx3, kp3 = jax.random.split(key, 6)

    # --- 1) small shape matching the module's forward ----------------------
    batch, seq, in_dim, out_dim = 2, 8, 32, 16
    x = jax.random.normal(kx, (batch, seq, in_dim), dtype=jnp.float32)
    weight, scale = init_params(kp, in_dim, out_dim, init_scale=1.0)
    w_t = prepare_weight(weight)                     # one-time prep, not per call
    out = jax.block_until_ready(linear_head_scaled_cos_norm(x, w_t, scale, out_dim))
    ref = _reference(x, weight, scale)
    assert out.shape == (batch, seq, out_dim)
    assert jnp.allclose(out, ref, atol=1e-5, rtol=1e-5), "mismatch vs reference"

    # --- 2) ragged rows + sub-block out_dim (lane-dense padded weight) -----
    rows2, in_dim2, out_dim2 = 20, 32, 640
    x2 = jax.random.normal(kx2, (rows2, in_dim2), dtype=jnp.float32)
    weight2, scale2 = init_params(kp2, in_dim2, out_dim2, init_scale=2.0)
    w_t2 = prepare_weight(weight2)
    out2 = jax.block_until_ready(
        linear_head_scaled_cos_norm(x2, w_t2, scale2, out_dim2))
    ref2 = _reference(x2, weight2, scale2)
    assert out2.shape == (rows2, out_dim2)
    assert jnp.allclose(out2, ref2, atol=1e-5, rtol=1e-5), "mismatch (ragged)"

    # --- 3) fully tiled path: multiple row & out blocks (exercises r-cache) --
    rows3, in_dim3, out_dim3 = 384, 64, 512
    x3 = jax.random.normal(kx3, (rows3, in_dim3), dtype=jnp.float32)
    weight3, scale3 = init_params(kp3, in_dim3, out_dim3, init_scale=0.5)
    w_t3 = prepare_weight(weight3, block_rows=128, block_cols=256)
    out3 = jax.block_until_ready(
        linear_head_scaled_cos_norm(x3, w_t3, scale3, out_dim3,
                                    block_rows=128, block_cols=256))
    ref3 = _reference(x3, weight3, scale3)
    assert out3.shape == (rows3, out_dim3)
    assert jnp.allclose(out3, ref3, atol=1e-4, rtol=1e-4), "mismatch (tiled)"

    print("KERNEL_OK")
</pallas_src>

<mosaic_0001>
module attributes {stable_mosaic.version = 11 : i64} {
  func.func @_linear_head_kernel(%arg0: i32, %arg1: i32, %arg2: memref<1xf32, #tpu.memory_space<smem>>, %arg3: memref<16x32xf32, #tpu.memory_space<vmem>>, %arg4: memref<32x128xf32, #tpu.memory_space<vmem>>, %arg5: memref<16x128xf32, #tpu.memory_space<vmem>>) attributes {dimension_semantics = [#tpu.dimension_semantics<arbitrary>, #tpu.dimension_semantics<parallel>], iteration_bounds = array<i64: 1, 1>, scalar_prefetch = 0 : i64, scratch_operands = 0 : i64, tpu.core_type = #tpu.core_type<tc>, window_params = [{transform_indices = @transform_0, window_bounds = array<i64: 1>}, {transform_indices = @transform_1, window_bounds = array<i64: 16, 32>}, {transform_indices = @transform_2, window_bounds = array<i64: 32, 128>}, {transform_indices = @transform_3, window_bounds = array<i64: 16, 128>}]} {
    %c0 = arith.constant 0 : index
    %c0_0 = arith.constant 0 : index
    %0 = vector.load %arg3[%c0, %c0_0] : memref<16x32xf32, #tpu.memory_space<vmem>>, vector<16x32xf32>
    %1 = arith.mulf %0, %0 : vector<16x32xf32>
    %cst = arith.constant dense<0.000000e+00> : vector<16xf32>
    %2 = vector.multi_reduction <add>, %1, %cst [1] : vector<16x32xf32> to vector<16xf32>
    %3 = vector.shape_cast %2 : vector<16xf32> to vector<16x1xf32>
    %c0_1 = arith.constant 0 : index
    %4 = memref.load %arg2[%c0_1] : memref<1xf32, #tpu.memory_space<smem>>
    %cst_2 = arith.constant 1.000000e-24 : f32
    %5 = vector.broadcast %cst_2 : f32 to vector<16x1xf32>
    %6 = arith.maximumf %3, %5 : vector<16x1xf32>
    %7 = math.rsqrt %6 : vector<16x1xf32>
    %8 = vector.broadcast %4 : f32 to vector<16x1xf32>
    %9 = arith.mulf %8, %7 : vector<16x1xf32>
    %c0_3 = arith.constant 0 : index
    %c0_4 = arith.constant 0 : index
    %10 = vector.load %arg4[%c0_3, %c0_4] : memref<32x128xf32, #tpu.memory_space<vmem>>, vector<32x128xf32>
    %cst_5 = arith.constant dense<0.000000e+00> : vector<16x128xf32>
    %11 = tpu.matmul %0, %10, %cst_5 {dimension_numbers = #tpu.dot_dimension_numbers<[1], [0], [0], [1], [0, 0, 1, 1], [], []>} : vector<16x32xf32>, vector<32x128xf32>, vector<16x128xf32> -> vector<16x128xf32>
    %12 = vector.broadcast %9 : vector<16x1xf32> to vector<16x128xf32>
    %13 = arith.mulf %11, %12 : vector<16x128xf32>
    %c0_6 = arith.constant 0 : index
    %c0_7 = arith.constant 0 : index
    %14 = vector.load %arg5[%c0_6, %c0_7] : memref<16x128xf32, #tpu.memory_space<vmem>>, vector<16x128xf32>
    tpu.vector_store %arg5[%c0_6, %c0_7], %13 {strides = array<i32>} : memref<16x128xf32, #tpu.memory_space<vmem>>, vector<16x128xf32>,
    return
  }
  func.func @transform_0(%arg0: i32, %arg1: i32) -> i32 {
    %c0_i32 = arith.constant 0 : i32
    %c0_i32_0 = arith.constant 0 : i32
    return %c0_i32 : i32
  }
  func.func @transform_1(%arg0: i32, %arg1: i32) -> (i32, i32) {
    %c0_i32 = arith.constant 0 : i32
    %c0_i32_0 = arith.constant 0 : i32
    return %arg1, %c0_i32 : i32, i32
  }
  func.func @transform_2(%arg0: i32, %arg1: i32) -> (i32, i32) {
    %c0_i32 = arith.constant 0 : i32
    %c0_i32_0 = arith.constant 0 : i32
    return %c0_i32, %arg0 : i32, i32
  }
  func.func @transform_3(%arg0: i32, %arg1: i32) -> (i32, i32) {
    %c0_i32 = arith.constant 0 : i32
    return %arg1, %arg0 : i32, i32
  }
}

</mosaic_0001>

<llo_original>
// kernel: linear_head_scaled_cos_norm.1
$region0: #{linear_head_scaled_cos_norm.1}
  #allocation0 [shape = 'u32[]', space=smem, size = 0x4, offset = 0x4, fixed_abs, tag = 'smem constant byte address 0x4 - core index']
  #allocation1 [shape = 'u32[72,128]{1,0:T(1,128)}', space=vmem, size = 0x9000, scoped, tag = 'internal scratch']
  #allocation2 [shape = 'f32[1]{0:T(128)S(6)}', space=smem, size = 0x200, scoped, tag = 'scoped memory for linear_head_scaled_cos_norm.1']
  %s0 = inlined_call_operand.<no memory space> [shape: f32[1], index: 0, kind: input, shape index: {}]
  %s1 = inlined_call_operand.hbm [shape: f32[16,32], index: 1, kind: input, shape index: {}]
  %s2 = inlined_call_operand.hbm [shape: f32[32,128], index: 2, kind: input, shape index: {}]
  %s3 = inlined_call_operand.vmem [shape: f32[16,128], index: 3, kind: output, shape index: {}]
  %s4 = sld [smem:[#allocation0]]
  $region30: #{linear_head_scaled_cos_norm.1} parent=0
    _
  %s6 = ssub.s32 1, %s4
  %s7 = scalar_select 0, %s6, %s4
  %8 = sst [smem:[#allocation2]] %s0
  $region1: #{linear_head_scaled_cos_norm.1} parent=0
    #allocation3 [shape = 'u8[8192]{0}', space=vmem, size = 0x2000, scoped, tag = 'input window, operand 1, single buffered']
    #allocation4 [shape = 's32[1]{0}', space=sflag, size = 0x4, scoped, tag = 'scoped memory for linear_head_scaled_cos_norm.1']
    #allocation5 [shape = 'u8[16384]{0}', space=vmem, size = 0x4000, scoped, tag = 'input window, operand 2, single buffered']
    #allocation6 [shape = 's32[1]{0}', space=sflag, size = 0x4, scoped, tag = 'scoped memory for linear_head_scaled_cos_norm.1']
    %9 = vsyncpa [#allocation4], 0
    %10 = vsyncpa [#allocation6], 0
    // Predicated region
    $region2: #{linear_head_scaled_cos_norm.1} parent=1 // pred_check
      _
    $region3: #{linear_head_scaled_cos_norm.1} parent=1 // pred_check_branch
      %12 = sbr.rel (0) target = $region5
    $region4: #{linear_head_scaled_cos_norm.1} parent=1 // pred_region
      _
    $region5: #{linear_head_scaled_cos_norm.1} parent=1 // pred_fallthru
      _
    // Predicated region
    $region6: #{linear_head_scaled_cos_norm.1} parent=1 // pred_check
      _
    $region7: #{linear_head_scaled_cos_norm.1} parent=1 // pred_check_branch
      %14 = sbr.rel (0) target = $region9
    $region8: #{linear_head_scaled_cos_norm.1} parent=1 // pred_region
      %16 = vsyncadd [#allocation4], 0
      %s17 = sshll.u32 %s1, 4
      %s18 = int_to_ptr.hbm [resolvable:$true] %s17
      %s19 = sshll.u32 [#allocation3], 4
      %s20 = int_to_ptr.vmem [resolvable:$true] %s19
      %25 = dma.hbm_to_vmem [thread:$0]  %s18, 256, %s20, [#allocation4], 128, 128, 8
    $region9: #{linear_head_scaled_cos_norm.1} parent=1 // pred_fallthru
      _
    // Predicated region
    $region10: #{linear_head_scaled_cos_norm.1} parent=1 // pred_check
      _
    $region11: #{linear_head_scaled_cos_norm.1} parent=1 // pred_check_branch
      %27 = sbr.rel (0) target = $region13
    $region12: #{linear_head_scaled_cos_norm.1} parent=1 // pred_region
      %29 = vsyncadd [#allocation6], 0
      %s30 = sshll.u32 %s2, 4
      %s31 = int_to_ptr.hbm [resolvable:$true] %s30
      %s32 = sshll.u32 [#allocation5], 4
      %s33 = int_to_ptr.vmem [resolvable:$true] %s32
      %38 = dma.hbm_to_vmem [thread:$0]  %s31, 512, %s33, [#allocation6], 128, 128, 8
    $region13: #{linear_head_scaled_cos_norm.1} parent=1 // pred_fallthru
      _
    // Predicated region
    $region14: #{linear_head_scaled_cos_norm.1} parent=1 // pred_check
      _
    $region15: #{linear_head_scaled_cos_norm.1} parent=1 // pred_check_branch
      %40 = sbr.rel (0) target = $region17
    $region16: #{linear_head_scaled_cos_norm.1} parent=1 // pred_region
      %42 = dma.done [#allocation4], 256
    $region17: #{linear_head_scaled_cos_norm.1} parent=1 // pred_fallthru
      _
    // Predicated region
    $region18: #{linear_head_scaled_cos_norm.1} parent=1 // pred_check
      _
    $region19: #{linear_head_scaled_cos_norm.1} parent=1 // pred_check_branch
      %44 = sbr.rel (0) target = $region21
    $region20: #{linear_head_scaled_cos_norm.1} parent=1 // pred_region
      %46 = dma.done [#allocation6], 512
    $region21: #{linear_head_scaled_cos_norm.1} parent=1 // pred_fallthru
      _
    %v47 = vld [vmem:[#allocation3] sm:$0xff]
    %v48 = vld [vmem:[#allocation3 + $0x8] sm:$0xff]
    %v49 = vmul.f32 %v47, %v47
    %v50 = vmul.f32 %v48, %v48
    %vm51 = vcmask 261120
    %v52 = vsel %vm51, %v49, 0.0
    %53 = vadd.xlane.f32.xlu0 %v52
    %v54 = vpop.xlane.xlu0 %53
    %v55 = vsel %vm51, %v50, 0.0
    %56 = vadd.xlane.f32.xlu0 %v55
    %v57 = vpop.xlane.xlu0 %56
    %s58 = sld [smem:[#allocation2]]
    %v59 = vmax.f32 %v54, 1e-24
    %v60 = vmax.f32 %v57, 1e-24
    %v61 = vrsqrt.pop %v59
    %v62 = vmul.f32 %v61, %v59
    %v63 = vmul.f32 %v62, %v61
    %v64 = vmul.f32 0.5, %v63
    %v65 = vsub.f32 1.5, %v64
    %v66 = vmul.f32 %v61, %v65
    %vm67 = vweird.f32 %v59
    %vm68 = vweird.f32 %v61
    %vm69 = vmor %vm67, %vm68
    %v70 = vsel %vm69, %v61, %v66
    %v71 = vrsqrt.pop %v60
    %v72 = vmul.f32 %v71, %v60
    %v73 = vmul.f32 %v72, %v71
    %v74 = vmul.f32 0.5, %v73
    %v75 = vsub.f32 1.5, %v74
    %v76 = vmul.f32 %v71, %v75
    %vm77 = vweird.f32 %v60
    %vm78 = vweird.f32 %v71
    %vm79 = vmor %vm77, %vm78
    %v80 = vsel %vm79, %v71, %v76
    %v81 = vstv %s58
    %v82 = vmul.f32 %v81, %v70
    %v83 = vmul.f32 %v81, %v80
    %v84 = vld [vmem:[#allocation5] sm:$0xff]
    %v85 = vld [vmem:[#allocation5 + $0x8] sm:$0xff]
    %v86 = vld [vmem:[#allocation5 + $0x10] sm:$0xff]
    %v87 = vld [vmem:[#allocation5 + $0x18] sm:$0xff]
    %v89 = vsel %vm51, %v47, 0
    %v92 = vsel %vm51, %v48, 0
    %94 = vmatpush.msra.mxu0 0.0
    %95 = vmatpush.msra.mxu0 0.0
    %96 = vmatpush.msra.mxu0 0.0
    %97 = vmatpush.msra.mxu0 0.0
    %98 = vmatpush.msra.mxu0 0.0
    %99 = vmatpush.msra.mxu0 0.0
    %100 = vmatpush.msra.mxu0 0.0
    %101 = vmatpush.msra.mxu0 0.0
    %102 = vmatpush.msra.mxu0 0.0
    %103 = vmatpush.msra.mxu0 0.0
    %104 = vmatpush.msra.mxu0 0.0
    %105 = vmatpush.msra.mxu0 0.0
    %106 = vmatpush.msra.mxu0 %v87
    %107 = vmatpush.msra.mxu0 %v86
    %108 = vmatpush.msra.mxu0 %v85
    %109 = vmatpush.msra.mxu0 %v84
    %110 = vmatmul.f32.gmra.mxu0 %v89
    %v111 = vpop.f32.mrf.mxu0
    %v112 = vadd.f32 0.0, %v111
    %113 = vmatmul.f32.gmra.mxu0 %v92
    %v114 = vpop.f32.mrf.mxu0
    %v115 = vadd.f32 0.0, %v114
    %116 = vdwg.mxu0
    %v117 = vmul.f32 %v112, %v82
    %v118 = vmul.f32 %v115, %v83
    %119 = vst [vmem:[%s3] sm:$0xff] %v117
    %120 = vst [vmem:[%s3 + $0x8] sm:$0xff] %v118
    // Predicated region
    $region22: #{linear_head_scaled_cos_norm.1} parent=1 // pred_check
      _
    $region23: #{linear_head_scaled_cos_norm.1} parent=1 // pred_check_branch
      %122 = sbr.rel (0) target = $region25
    $region24: #{linear_head_scaled_cos_norm.1} parent=1 // pred_region
      _
    $region25: #{linear_head_scaled_cos_norm.1} parent=1 // pred_fallthru
      _
    // Predicated region
    $region26: #{linear_head_scaled_cos_norm.1} parent=1 // pred_check
      _
    $region27: #{linear_head_scaled_cos_norm.1} parent=1 // pred_check_branch
      %124 = sbr.rel (0) target = $region29
    $region28: #{linear_head_scaled_cos_norm.1} parent=1 // pred_region
      _
    $region29: #{linear_head_scaled_cos_norm.1} parent=1 // pred_fallthru
      _
    %125 = vsyncpa [#allocation4], 1
    %126 = vsyncpa [#allocation6], 1

</llo_original>
